<compile_context>
chip_gen: v7x
topology: tpu7x:2x2x1
jax: 0.10.0
libtpu: 0.0.40
codegen_flags: <defaults>
</compile_context>

<pallas_src>
import functools

import numpy as np
import jax
import jax.numpy as jnp
from jax.experimental import pallas as pl
from jax.experimental.pallas import tpu as pltpu

_LANE = 128
_SUBLANE = 8
_K_TILE_CAP = 2048          # contraction tile cap (multiple of 128)


def _round_up(x, m):
    return ((x + m - 1) // m) * m


@functools.lru_cache(maxsize=None)
def _tpu_config():
    """(M/N tile cap, scoped VMEM limit bytes) for the local TPU generation."""
    try:
        vmem_cap = int(pltpu.get_tpu_info().vmem_capacity_bytes)
    except Exception:                              # no TPU / older API: be safe
        vmem_cap = 64 * 1024 * 1024                # v7x per-core physical
    cap_mn = 512 if vmem_cap >= 96 * 1024 * 1024 else 256
    vmem_limit = max(32 * 1024 * 1024,
                     min(vmem_cap * 3 // 4, 112 * 1024 * 1024))
    return cap_mn, vmem_limit


# ------------------------------ kernel bodies ------------------------------ #

def _rows_kernel(xr_ref, xi_ref, mr_ref, mi_ref, ms_ref, or_ref, oi_ref):
    """out[i,j] += (Xr + i Xi)[i,k] @ (Mr + i Mi)[k,j]  (Gauss 3-multiply).

    Grid = (N tiles, M tiles, K tiles); output tile resident across k.
    """
    @pl.when(pl.program_id(2) == 0)
    def _():
        or_ref[...] = jnp.zeros_like(or_ref)
        oi_ref[...] = jnp.zeros_like(oi_ref)

    xr = xr_ref[...]
    xi = xi_ref[...]
    m1 = jnp.dot(xr, mr_ref[...], preferred_element_type=jnp.float32)
    m2 = jnp.dot(xi, mi_ref[...], preferred_element_type=jnp.float32)
    m3 = jnp.dot(xr + xi, ms_ref[...], preferred_element_type=jnp.float32)
    or_ref[...] += m1 - m2
    oi_ref[...] += m3 - (m1 + m2)


def _cols_kernel(dr_ref, di_ref, ds_ref, yr_ref, yi_ref, or_ref, oi_ref):
    """out[b,i,j] += (Dr + i Di)[i,k] @ (Yr + i Yi)[b,k,j]  (Gauss 3-multiply).

    Grid = (R tiles, B, N tiles, K tiles); output tile resident across k.
    """
    @pl.when(pl.program_id(3) == 0)
    def _():
        or_ref[...] = jnp.zeros_like(or_ref)
        oi_ref[...] = jnp.zeros_like(oi_ref)

    yr = yr_ref[...]
    yi = yi_ref[...]
    m1 = jnp.dot(dr_ref[...], yr, preferred_element_type=jnp.float32)
    m2 = jnp.dot(di_ref[...], yi, preferred_element_type=jnp.float32)
    m3 = jnp.dot(ds_ref[...], yr + yi, preferred_element_type=jnp.float32)
    or_ref[...] += m1 - m2
    oi_ref[...] += m3 - (m1 + m2)


# ------------------------------- tile pickers ------------------------------ #

def _pick_mn_tile(n, cap):
    """Multiple-of-8 tile (dimension will be zero-padded up to the tile)."""
    return min(cap, _round_up(n, _SUBLANE))


def _pick_lane_tile(n_pad, cap):
    """Largest multiple of 128 <= cap that divides n_pad (n_pad % 128 == 0)."""
    t = max(_LANE, (min(n_pad, cap) // _LANE) * _LANE)
    while n_pad % t:
        t -= _LANE
    return t


def _pick_k_tile(k):
    """(tile, padded extent) for the contraction dimension."""
    if k <= _K_TILE_CAP:
        return k, k                       # single K step, full-dim block
    k_pad = _round_up(k, _LANE)
    tk = _K_TILE_CAP
    while k_pad % tk:
        tk -= _LANE
    return tk, k_pad


def _pick_left_tiles(r, n_pad, cap):
    """Row tile + padded row count for the column-FFT (left) DFT matrix."""
    tn = _pick_lane_tile(n_pad, cap)
    tm = _pick_mn_tile(r, cap)
    r_pad = _round_up(r, tm)
    # Keep both v7x TensorCores busy even for tiny single-tile problems.
    if (n_pad // tn) * (r_pad // tm) == 1 and r >= 2 * _SUBLANE:
        tm = _round_up((r + 1) // 2, _SUBLANE)
        r_pad = _round_up(r, tm)
    return tm, r_pad


# ------------------------------ pallas wrappers ---------------------------- #

def _right_cmatmul(x_re, x_im, m_re, m_im, m_sum):
    """(x_re + i x_im) @ (m_re + i m_im); batch rows fused into M.

    x_*: (M, K) f32.  m_*: (K_pad, N) f32 with N % 128 == 0 and K_pad >= K
    (zero-padded contraction rows).  Returns f32 pair of shape (M_pad, N).
    """
    cap_mn, vmem_limit = _tpu_config()
    M, K = x_re.shape
    K_pad, N = m_re.shape

    tn = _pick_lane_tile(N, cap_mn)
    tk, _ = _pick_k_tile(K_pad)
    tm = _pick_mn_tile(M, cap_mn)
    m_pad = _round_up(M, tm)
    if (N // tn) * (m_pad // tm) == 1 and M >= 2 * _SUBLANE:
        tm = _round_up((M + 1) // 2, _SUBLANE)     # >= 2 parallel tiles (v7x)
        m_pad = _round_up(M, tm)

    pad_rows = m_pad - M
    pad_cols = K_pad - K
    if pad_rows or pad_cols:
        cfg = ((0, pad_rows), (0, pad_cols))
        x_re = jnp.pad(x_re, cfg)                  # zero rows/cols -> zero out
        x_im = jnp.pad(x_im, cfg)

    # Matrices stationary along the inner loops; x planes streamed.
    grid = (N // tn, m_pad // tm, K_pad // tk)
    x_spec = pl.BlockSpec((tm, tk), lambda j, i, k: (i, k))
    m_spec = pl.BlockSpec((tk, tn), lambda j, i, k: (k, j))
    o_spec = pl.BlockSpec((tm, tn), lambda j, i, k: (i, j))
    # TODO(synk): pipeline_mode=pl.Buffered(1) on m_spec (never re-fetched in
    # the inner loop) would free a few MiB of v7x VMEM; left at default depth.

    flops = 6 * m_pad * N * K_pad                  # 3 real matmuls, 2*M*N*K each
    bytes_accessed = 4 * (2 * m_pad * K_pad + 3 * K_pad * N + 2 * m_pad * N)

    out_re, out_im = pl.pallas_call(
        _rows_kernel,
        grid_spec=pltpu.PrefetchScalarGridSpec(
            num_scalar_prefetch=0,
            grid=grid,
            in_specs=[x_spec, x_spec, m_spec, m_spec, m_spec],
            out_specs=[o_spec, o_spec],
        ),
        out_shape=(jax.ShapeDtypeStruct((m_pad, N), jnp.float32),
                   jax.ShapeDtypeStruct((m_pad, N), jnp.float32)),
        compiler_params=pltpu.CompilerParams(
            dimension_semantics=("parallel", "parallel", "arbitrary"),
            vmem_limit_bytes=vmem_limit),
        cost_estimate=pl.CostEstimate(flops=flops, transcendentals=0,
                                      bytes_accessed=bytes_accessed),
    )(x_re, x_im, m_re, m_im, m_sum)
    return out_re, out_im


def _left_cmatmul(d_re, d_im, d_sum, y_re, y_im, tm):
    """(d_re + i d_im) @ (y_re + i y_im) per batch (column transform).

    d_*: (R_pad, K_pad) f32 with R_pad % tm == 0 (zero-padded rows).
    y_*: (B, K, N) f32 with N % 128 == 0.  Returns f32 pair (B, R_pad, N).
    """
    cap_mn, vmem_limit = _tpu_config()
    r_pad, k_pad = d_re.shape
    B, K, N = y_re.shape

    tn = _pick_lane_tile(N, cap_mn)
    tk, _ = _pick_k_tile(k_pad)
    if k_pad != K:
        # TODO(synk): for >2048-high fields this K-padding copies the pass-1
        # intermediate once; could be folded into pass 1's out_spec instead.
        cfg = ((0, 0), (0, k_pad - K), (0, 0))
        y_re = jnp.pad(y_re, cfg)
        y_im = jnp.pad(y_im, cfg)

    # D (3 planes) stationary; Y (2 planes) streamed along the inner loops.
    grid = (r_pad // tm, B, N // tn, k_pad // tk)
    d_spec = pl.BlockSpec((tm, tk), lambda i, b, j, k: (i, k))
    y_spec = pl.BlockSpec((None, tk, tn), lambda i, b, j, k: (b, k, j))
    o_spec = pl.BlockSpec((None, tm, tn), lambda i, b, j, k: (b, i, j))

    flops = 6 * B * r_pad * N * k_pad
    bytes_accessed = 4 * (3 * r_pad * k_pad + 2 * B * k_pad * N
                          + 2 * B * r_pad * N)

    out_re, out_im = pl.pallas_call(
        _cols_kernel,
        grid_spec=pltpu.PrefetchScalarGridSpec(
            num_scalar_prefetch=0,
            grid=grid,
            in_specs=[d_spec, d_spec, d_spec, y_spec, y_spec],
            out_specs=[o_spec, o_spec],
        ),
        out_shape=(jax.ShapeDtypeStruct((B, r_pad, N), jnp.float32),
                   jax.ShapeDtypeStruct((B, r_pad, N), jnp.float32)),
        compiler_params=pltpu.CompilerParams(
            dimension_semantics=("parallel", "parallel", "parallel",
                                 "arbitrary"),
            vmem_limit_bytes=vmem_limit),
        cost_estimate=pl.CostEstimate(flops=flops, transcendentals=0,
                                      bytes_accessed=bytes_accessed),
    )(d_re, d_im, d_sum, y_re, y_im)
    return out_re, out_im


# ------------------------- DFT matrix construction ------------------------- #

def _centered_dft_matrix(n):
    """S F R: F = (1/sqrt(n))-normalized DFT, S = fftshift, R = ifftshift."""
    k = np.arange(n)
    F = np.exp(-2j * np.pi * np.outer(k, k) / n) / np.sqrt(n)
    S = np.fft.fftshift(np.eye(n), axes=0)       # S @ v == fftshift(v)
    R = np.fft.ifftshift(np.eye(n), axes=0)      # R @ v == ifftshift(v)
    return S @ F @ R


def _row_dft_operands(w):
    """Right-multiply operands C_w^T: output cols lane-padded to 128k, plus
    (Mr + Mi) precomputed for the Gauss 3-multiply product."""
    Mw = _centered_dft_matrix(w).T               # X @ Mw == rows FFT'd
    n_pad = _round_up(w, _LANE)
    _, k_pad = _pick_k_tile(w)
    Mp = np.zeros((k_pad, n_pad), np.complex128)
    Mp[:w, :w] = Mw
    return (jnp.asarray(Mp.real, jnp.float32),
            jnp.asarray(Mp.imag, jnp.float32),
            jnp.asarray(Mp.real + Mp.imag, jnp.float32))


def _col_dft_operands(h, r_pad):
    """Left-multiply operands C_h: rows zero-padded to r_pad (a multiple of the
    row tile), contraction cols zero-padded when K-tiling is needed."""
    Dh = _centered_dft_matrix(h)                 # Dh @ Y == cols FFT'd
    _, k_pad = _pick_k_tile(h)
    Dp = np.zeros((r_pad, k_pad), np.complex128)
    Dp[:h, :h] = Dh
    return (jnp.asarray(Dp.real, jnp.float32),
            jnp.asarray(Dp.imag, jnp.float32),
            jnp.asarray(Dp.real + Dp.imag, jnp.float32))


# ------------------------- FraunhoferPropagation ---------------------------- #

def _stacked_abs(field):
    # |field| for stacked-complex representation (..., 2)
    return jnp.sqrt(jnp.sum(field ** 2, axis=-1))


class FraunhoferPropagation:
    """JAX/Pallas port of the PyTorch FraunhoferPropagation forward pass."""

    def __init__(self, propagation_distance, slm_resolution, slm_pixel_pitch,
                 image_resolution=None, wavelength=5.32e-07,
                 propagation_parameters=None, device=None):
        self.focal_length = propagation_distance
        slm_resolution = np.array(slm_resolution)
        slm_pixel_pitch = np.array(slm_pixel_pitch)
        slm_bandwidth = slm_pixel_pitch * slm_resolution
        slm_fourier_sampling = 1.0 / slm_bandwidth
        self.image_native_pitch = (slm_fourier_sampling * wavelength
                                   * self.focal_length)

        self.slm_resolution = slm_resolution
        self.slm_pixel_pitch = slm_pixel_pitch
        self.propagation_distance = propagation_distance
        self.wavelength = wavelength
        self.dev = device
        if image_resolution is None:
            self.image_resolution = self.slm_resolution
        else:
            self.image_resolution = np.array(image_resolution)
        self.image_pixel_pitch = self.image_native_pitch
        self.slm_size = self.slm_pixel_pitch * self.slm_resolution
        self.image_size = self.image_pixel_pitch * self.image_resolution

        pp = dict(propagation_parameters) if propagation_parameters else {}
        self.padding_type = pp.pop('padding_type', 'zero')
        self.fraunhofer_crop_image = pp.pop('fraunhofer_crop_image', True)
        self.propagation_parameters = pp

        self._op_cache = {}   # (H, W) -> dict of padded DFT operands + tiles

    # ---- padding / cropping glue (plain JAX) ----
    def _get_pad_value(self, field):
        if self.padding_type == 'zero':
            return 0.0
        elif self.padding_type == 'median':
            return jnp.median(_stacked_abs(field))
        else:
            raise ValueError('Unknown padding type')

    def _pad_smaller_dims(self, field, target_shape, padval=None):
        if padval is None:
            padval = self._get_pad_value(field)
        H, W = field.shape[1], field.shape[2]
        th, tw = int(target_shape[0]), int(target_shape[1])
        ph, pw = max(th - H, 0), max(tw - W, 0)
        if ph == 0 and pw == 0:
            return field
        pad_cfg = ((0, 0),
                   (ph // 2, ph - ph // 2),
                   (pw // 2, pw - pw // 2),
                   (0, 0))
        return jnp.pad(field, pad_cfg, mode='constant', constant_values=padval)

    def _crop_larger_dims(self, field, target_shape):
        H, W = field.shape[1], field.shape[2]
        th, tw = min(int(target_shape[0]), H), min(int(target_shape[1]), W)
        if th == H and tw == W:
            return field
        sh, sw = (H - th) // 2, (W - tw) // 2
        return field[:, sh:sh + th, sw:sw + tw, :]

    # ---- centered, orthonormal 2-D FFT via the Pallas complex matmuls ----
    def _get_operands(self, H, W):
        key = (int(H), int(W))
        if key not in self._op_cache:
            cap_mn, _ = _tpu_config()
            w_pad = _round_up(W, _LANE)
            tm_h, r_pad = _pick_left_tiles(H, w_pad, cap_mn)
            self._op_cache[key] = dict(
                w_mats=_row_dft_operands(W),
                w_pad=w_pad,
                d_mats=_col_dft_operands(H, r_pad),
                d_tm=tm_h,
            )
        return self._op_cache[key]

    def _fft_normalized(self, field):
        B, H, W, _ = field.shape
        ops = self._get_operands(H, W)
        w_re, w_im, w_sum = ops['w_mats']
        d_re, d_im, d_sum = ops['d_mats']
        w_pad = ops['w_pad']

        # Planar real/imag representation between passes; stack once at the end.
        x_re = field[..., 0].reshape(B * H, W)
        x_im = field[..., 1].reshape(B * H, W)

        # Pass 1: per-row transform X @ C_W^T, batch fused into M; output is
        # lane-padded (zeros in columns W..w_pad).
        y_re, y_im = _right_cmatmul(x_re, x_im, w_re, w_im, w_sum)
        y_re = y_re[:B * H].reshape(B, H, w_pad)
        y_im = y_im[:B * H].reshape(B, H, w_pad)

        # Pass 2: per-column transform C_H @ Y, consuming the pass-1 layout
        # directly (no host-side transpose between passes).
        z_re, z_im = _left_cmatmul(d_re, d_im, d_sum, y_re, y_im, ops['d_tm'])

        # Crop padded rows/lanes and restack (real, imag).
        return jnp.stack([z_re[:, :H, :W], z_im[:, :H, :W]], axis=-1)

    def forward(self, input_field):
        target = self.image_resolution
        input_padded = self._pad_smaller_dims(input_field, target)
        if self.fraunhofer_crop_image:
            output_field = self._fft_normalized(input_padded)
            return self._crop_larger_dims(output_field, target)
        else:
            input_padded_cropped = self._crop_larger_dims(input_padded, target)
            return self._fft_normalized(input_padded_cropped)

    __call__ = forward


# ---------------------------------- main ----------------------------------- #

def _reference_fft(field):
    xc = field[..., 0] + 1j * field[..., 1]
    ref = jnp.fft.fftshift(
        jnp.fft.fft2(jnp.fft.ifftshift(xc, axes=(-2, -1)), norm='ortho'),
        axes=(-2, -1))
    return jnp.stack([ref.real, ref.imag], axis=-1).astype(jnp.float32)


if __name__ == "__main__":
    key = jax.random.PRNGKey(0)
    k1, k2, k3, k4 = jax.random.split(key, 4)

    # Test 1: small square field (exercises the >=2-parallel-tiles split).
    B, H, W = 2, 16, 16
    field = jnp.stack(
        [jax.random.normal(k1, (B, H, W), jnp.float32),
         jax.random.normal(k2, (B, H, W), jnp.float32)], axis=-1)  # (B,H,W,2)

    prop = FraunhoferPropagation(
        propagation_distance=0.1,
        slm_resolution=(H, W),
        slm_pixel_pitch=(6.4e-6, 6.4e-6),
        image_resolution=None,
        wavelength=5.32e-07,
        propagation_parameters={'padding_type': 'zero'},
    )
    out = jax.block_until_ready(prop(field))
    assert out.shape == (B, H, W, 2)
    np.testing.assert_allclose(np.asarray(out), np.asarray(_reference_fft(field)),
                               rtol=1e-4, atol=1e-4)

    # Test 2: non-square, non-128-multiple field (exercises row padding, lane
    # padding / crop, and the tile-split path on both passes).
    B2, H2, W2 = 2, 24, 40
    field2 = jnp.stack(
        [jax.random.normal(k3, (B2, H2, W2), jnp.float32),
         jax.random.normal(k4, (B2, H2, W2), jnp.float32)], axis=-1)
    prop2 = FraunhoferPropagation(
        propagation_distance=0.1,
        slm_resolution=(H2, W2),
        slm_pixel_pitch=(6.4e-6, 6.4e-6),
    )
    out2 = jax.block_until_ready(prop2(field2))
    assert out2.shape == (B2, H2, W2, 2)
    np.testing.assert_allclose(np.asarray(out2), np.asarray(_reference_fft(field2)),
                               rtol=1e-4, atol=1e-4)

    print("KERNEL_OK")
</pallas_src>

<mosaic_0001>
module attributes {stable_mosaic.version = 11 : i64} {
  func.func @_rows_kernel(%arg0: i32, %arg1: i32, %arg2: i32, %arg3: memref<16x16xf32, #tpu.memory_space<vmem>>, %arg4: memref<16x16xf32, #tpu.memory_space<vmem>>, %arg5: memref<16x128xf32, #tpu.memory_space<vmem>>, %arg6: memref<16x128xf32, #tpu.memory_space<vmem>>, %arg7: memref<16x128xf32, #tpu.memory_space<vmem>>, %arg8: memref<16x128xf32, #tpu.memory_space<vmem>>, %arg9: memref<16x128xf32, #tpu.memory_space<vmem>>) attributes {dimension_semantics = [#tpu.dimension_semantics<parallel>, #tpu.dimension_semantics<parallel>, #tpu.dimension_semantics<arbitrary>], iteration_bounds = array<i64: 1, 2, 1>, scalar_prefetch = 0 : i64, scratch_operands = 0 : i64, tpu.core_type = #tpu.core_type<tc>, window_params = [{transform_indices = @transform_0, window_bounds = array<i64: 16, 16>}, {transform_indices = @transform_1, window_bounds = array<i64: 16, 16>}, {transform_indices = @transform_2, window_bounds = array<i64: 16, 128>}, {transform_indices = @transform_3, window_bounds = array<i64: 16, 128>}, {transform_indices = @transform_4, window_bounds = array<i64: 16, 128>}, {transform_indices = @transform_5, window_bounds = array<i64: 16, 128>}, {transform_indices = @transform_6, window_bounds = array<i64: 16, 128>}]} {
    %c0_i32 = arith.constant 0 : i32
    %0 = arith.cmpi eq, %arg2, %c0_i32 : i32
    %1 = arith.extui %0 : i1 to i32
    %c0_i32_0 = arith.constant 0 : i32
    %2 = arith.cmpi ne, %1, %c0_i32_0 : i32
    scf.if %2 {
      %cst_20 = arith.constant 0.000000e+00 : f32
      %21 = vector.broadcast %cst_20 : f32 to vector<16x128xf32>
      %c0_21 = arith.constant 0 : index
      %c0_22 = arith.constant 0 : index
      %22 = vector.load %arg8[%c0_21, %c0_22] : memref<16x128xf32, #tpu.memory_space<vmem>>, vector<16x128xf32>
      tpu.vector_store %arg8[%c0_21, %c0_22], %21 {strides = array<i32>} : memref<16x128xf32, #tpu.memory_space<vmem>>, vector<16x128xf32>,
      %cst_23 = arith.constant 0.000000e+00 : f32
      %23 = vector.broadcast %cst_23 : f32 to vector<16x128xf32>
      %c0_24 = arith.constant 0 : index
      %c0_25 = arith.constant 0 : index
      %24 = vector.load %arg9[%c0_24, %c0_25] : memref<16x128xf32, #tpu.memory_space<vmem>>, vector<16x128xf32>
      tpu.vector_store %arg9[%c0_24, %c0_25], %23 {strides = array<i32>} : memref<16x128xf32, #tpu.memory_space<vmem>>, vector<16x128xf32>,
    } else {
    }
    %c0 = arith.constant 0 : index
    %c0_1 = arith.constant 0 : index
    %3 = vector.load %arg3[%c0, %c0_1] : memref<16x16xf32, #tpu.memory_space<vmem>>, vector<16x16xf32>
    %c0_2 = arith.constant 0 : index
    %c0_3 = arith.constant 0 : index
    %4 = vector.load %arg4[%c0_2, %c0_3] : memref<16x16xf32, #tpu.memory_space<vmem>>, vector<16x16xf32>
    %c0_4 = arith.constant 0 : index
    %c0_5 = arith.constant 0 : index
    %5 = vector.load %arg5[%c0_4, %c0_5] : memref<16x128xf32, #tpu.memory_space<vmem>>, vector<16x128xf32>
    %cst = arith.constant dense<0.000000e+00> : vector<16x128xf32>
    %6 = tpu.matmul %3, %5, %cst {dimension_numbers = #tpu.dot_dimension_numbers<[1], [0], [0], [1], [0, 0, 1, 1], [], []>} : vector<16x16xf32>, vector<16x128xf32>, vector<16x128xf32> -> vector<16x128xf32>
    %c0_6 = arith.constant 0 : index
    %c0_7 = arith.constant 0 : index
    %7 = vector.load %arg6[%c0_6, %c0_7] : memref<16x128xf32, #tpu.memory_space<vmem>>, vector<16x128xf32>
    %cst_8 = arith.constant dense<0.000000e+00> : vector<16x128xf32>
    %8 = tpu.matmul %4, %7, %cst_8 {dimension_numbers = #tpu.dot_dimension_numbers<[1], [0], [0], [1], [0, 0, 1, 1], [], []>} : vector<16x16xf32>, vector<16x128xf32>, vector<16x128xf32> -> vector<16x128xf32>
    %9 = arith.addf %3, %4 : vector<16x16xf32>
    %c0_9 = arith.constant 0 : index
    %c0_10 = arith.constant 0 : index
    %10 = vector.load %arg7[%c0_9, %c0_10] : memref<16x128xf32, #tpu.memory_space<vmem>>, vector<16x128xf32>
    %cst_11 = arith.constant dense<0.000000e+00> : vector<16x128xf32>
    %11 = tpu.matmul %9, %10, %cst_11 {dimension_numbers = #tpu.dot_dimension_numbers<[1], [0], [0], [1], [0, 0, 1, 1], [], []>} : vector<16x16xf32>, vector<16x128xf32>, vector<16x128xf32> -> vector<16x128xf32>
    %c0_12 = arith.constant 0 : index
    %c0_13 = arith.constant 0 : index
    %12 = vector.load %arg8[%c0_12, %c0_13] : memref<16x128xf32, #tpu.memory_space<vmem>>, vector<16x128xf32>
    %13 = arith.subf %6, %8 : vector<16x128xf32>
    %14 = arith.addf %12, %13 : vector<16x128xf32>
    %c0_14 = arith.constant 0 : index
    %c0_15 = arith.constant 0 : index
    %15 = vector.load %arg8[%c0_14, %c0_15] : memref<16x128xf32, #tpu.memory_space<vmem>>, vector<16x128xf32>
    tpu.vector_store %arg8[%c0_14, %c0_15], %14 {strides = array<i32>} : memref<16x128xf32, #tpu.memory_space<vmem>>, vector<16x128xf32>,
    %c0_16 = arith.constant 0 : index
    %c0_17 = arith.constant 0 : index
    %16 = vector.load %arg9[%c0_16, %c0_17] : memref<16x128xf32, #tpu.memory_space<vmem>>, vector<16x128xf32>
    %17 = arith.addf %6, %8 : vector<16x128xf32>
    %18 = arith.subf %11, %17 : vector<16x128xf32>
    %19 = arith.addf %16, %18 : vector<16x128xf32>
    %c0_18 = arith.constant 0 : index
    %c0_19 = arith.constant 0 : index
    %20 = vector.load %arg9[%c0_18, %c0_19] : memref<16x128xf32, #tpu.memory_space<vmem>>, vector<16x128xf32>
    tpu.vector_store %arg9[%c0_18, %c0_19], %19 {strides = array<i32>} : memref<16x128xf32, #tpu.memory_space<vmem>>, vector<16x128xf32>,
    return
  }
  func.func @transform_0(%arg0: i32, %arg1: i32, %arg2: i32) -> (i32, i32) {
    %c0_i32 = arith.constant 0 : i32
    return %arg1, %arg2 : i32, i32
  }
  func.func @transform_1(%arg0: i32, %arg1: i32, %arg2: i32) -> (i32, i32) {
    %c0_i32 = arith.constant 0 : i32
    return %arg1, %arg2 : i32, i32
  }
  func.func @transform_2(%arg0: i32, %arg1: i32, %arg2: i32) -> (i32, i32) {
    %c0_i32 = arith.constant 0 : i32
    return %arg2, %arg0 : i32, i32
  }
  func.func @transform_3(%arg0: i32, %arg1: i32, %arg2: i32) -> (i32, i32) {
    %c0_i32 = arith.constant 0 : i32
    return %arg2, %arg0 : i32, i32
  }
  func.func @transform_4(%arg0: i32, %arg1: i32, %arg2: i32) -> (i32, i32) {
    %c0_i32 = arith.constant 0 : i32
    return %arg2, %arg0 : i32, i32
  }
  func.func @transform_5(%arg0: i32, %arg1: i32, %arg2: i32) -> (i32, i32) {
    %c0_i32 = arith.constant 0 : i32
    return %arg1, %arg0 : i32, i32
  }
  func.func @transform_6(%arg0: i32, %arg1: i32, %arg2: i32) -> (i32, i32) {
    %c0_i32 = arith.constant 0 : i32
    return %arg1, %arg0 : i32, i32
  }
}

</mosaic_0001>

<llo_original>
// kernel: tpu_custom_call.1
$region0: #{tpu_custom_call.1}
  #allocation0 [shape = 'u32[]', space=smem, size = 0x4, offset = 0x4, fixed_abs, tag = 'smem constant byte address 0x4 - core index']
  #allocation1 [shape = 'u32[144,128]{1,0:T(1,128)}', space=vmem, size = 0x12000, scoped, tag = 'internal scratch']
  %s0 = inlined_call_operand.vmem [shape: f32[32,16], index: 0, kind: input, shape index: {}]
  %s1 = inlined_call_operand.vmem [shape: f32[32,16], index: 1, kind: input, shape index: {}]
  %s2 = inlined_call_operand.vmem [shape: f32[16,128], index: 2, kind: input, shape index: {}]
  %s3 = inlined_call_operand.vmem [shape: f32[16,128], index: 3, kind: input, shape index: {}]
  %s4 = inlined_call_operand.vmem [shape: f32[16,128], index: 4, kind: input, shape index: {}]
  %s5 = inlined_call_operand.hbm [shape: f32[32,128], index: 5, kind: output, shape index: {0}]
  %s6 = inlined_call_operand.hbm [shape: f32[32,128], index: 6, kind: output, shape index: {1}]
  %7 = xla_tuple %s5, %s6
  %s8 = sld [smem:[#allocation0]]
  $region65: #{tpu_custom_call.1} parent=0
    _
  %s10 = ssub.s32 1, %s8
  %s11 = scalar_select 0, %s10, %s8
  $region1: #{tpu_custom_call.1} parent=0
    #allocation2 [shape = 'u8[16384]{0}', space=vmem, size = 0x4000, scoped, tag = 'output window, operand 0']
    #allocation3 [shape = 's32[2]{0}', space=sflag, size = 0x8, scoped, tag = 'scoped memory for tpu_custom_call.1']
    #allocation4 [shape = 'u8[16384]{0}', space=vmem, size = 0x4000, scoped, tag = 'output window, operand 1']
    #allocation5 [shape = 's32[2]{0}', space=sflag, size = 0x8, scoped, tag = 'scoped memory for tpu_custom_call.1']
    %12 = vsyncpa [#allocation3], 0
    %s13 = scalar_lea.sflag [#allocation3], 1
    %14 = vsyncpa %s13, 0
    %15 = vsyncpa [#allocation5], 0
    %s16 = scalar_lea.sflag [#allocation5], 1
    %17 = vsyncpa %s16, 0
    loop: start=0, step=1, limit=4
    $region2: #{tpu_custom_call.1} parent=1 // loop_pre_header
      _
    $region3: #{tpu_custom_call.1} parent=1 // loop_header
      %s19 = sphi 0, %s23
      %p20 = scmp.ge.s32.totalorder %s19, 4
      %s26 = sphi 0, %s45
      %s27 = sphi 0, %s41
      %s28 = sphi 0, %s37
      %s29 = sphi 0, %s26
      %s30 = sphi 0, %s27
      %s31 = sphi 0, %s28
      %s32 = sphi 0, %s29
      %s33 = sphi 0, %s30
      %s34 = sphi 0, %s31
      %s50 = sphi 0, %s52
      %s53 = sphi 0, %s50
      %s54 = sphi 0, %s53
      %s70 = sphi 0, %s54
      %s78 = sphi 0, %s80
      %s81 = sphi 0, %s78
      %s82 = sphi 0, %s81
      %s98 = sphi 0, %s82
      %s106 = sphi 0, %s108
      %s109 = sphi 0, %s106
      %s110 = sphi 0, %s109
      %s126 = sphi 0, %s110
      %s134 = sphi 0, %s136
      %s137 = sphi 0, %s134
      %s138 = sphi 0, %s137
      %s154 = sphi 0, %s138
      %s162 = sphi 0, %s164
      %s165 = sphi 0, %s162
      %s166 = sphi 0, %s165
      %s182 = sphi 0, %s166
      %s190 = sphi 0, %s192
      %s193 = sphi 0, %s190
      %s194 = sphi 0, %s193
      %s210 = sphi 0, %s194
      %s218 = sphi 0, %s220
      %s221 = sphi 0, %s218
      %s222 = sphi 0, %s221
      %s238 = sphi 0, %s222
    $region4: #{tpu_custom_call.1} parent=1 // loop_header_branch
      %22 = sbr.rel (%p20) target = $region8
    $region5: #{tpu_custom_call.1} parent=1 // loop_body
      %s24 = ssub.s32 %s19, 1
      %s25 = ssub.s32 %s19, 2
      %s35 = sadd.s32 1, %s28
      %p36 = scmp.ge.s32.totalorder %s35, 1
      %s37 = scalar_select %p36, 0, %s35
      %s38 = sadd.s32 1, %s27
      %s39 = scalar_select %p36, %s38, %s27
      %p40 = scmp.ge.s32.totalorder %s39, 2
      %s41 = scalar_select %p40, 0, %s39
      %s42 = sadd.s32 1, %s26
      %s43 = scalar_select %p40, %s42, %s26
      %p44 = scmp.ge.s32.totalorder %s43, 1
      %s45 = scalar_select %p44, 0, %s43
      %s46 = ssub.s32 %s27, %s41
      %s47 = ssub.s32 %s28, %s37
      %s48 = sor.u32 %s46, %s47
      %p49 = scmp.eq.s32.totalorder %s48, 0
      %s51 = sadd.s32 %s50, 1
      %s52 = scalar_select %p49, %s50, %s51
      %p55 = pneg %p49
      %p56 = scmp.eq.s32.totalorder %s19, 1
      %p57 = por %p55, %p56
      %p58 = scmp.ne.s32.totalorder %s50, %s53
      %p59 = scmp.eq.s32.totalorder %s19, 0
      %p60 = por %p58, %p59
      %p61 = scmp.ne.s32.totalorder %s50, %s53
      %p62 = scmp.eq.s32.totalorder %s24, 1
      %p63 = por %p61, %p62
      %p64 = scmp.ne.s32.totalorder %s53, %s54
      %p65 = scmp.eq.s32.totalorder %s24, 0
      %p66 = por %p64, %p65
      %p67 = scmp.ne.s32.totalorder %s53, %s54
      %p68 = scmp.eq.s32.totalorder %s25, 1
      %p69 = por %p67, %p68
      %p71 = scmp.ne.s32.totalorder %s54, %s70
      %p72 = scmp.eq.s32.totalorder %s25, 0
      %p73 = por %p71, %p72
      %s74 = ssub.s32 %s27, %s41
      %s75 = ssub.s32 %s28, %s37
      %s76 = sor.u32 %s74, %s75
      %p77 = scmp.eq.s32.totalorder %s76, 0
      %s79 = sadd.s32 %s78, 1
      %s80 = scalar_select %p77, %s78, %s79
      %p83 = pneg %p77
      %p84 = scmp.eq.s32.totalorder %s19, 1
      %p85 = por %p83, %p84
      %p86 = scmp.ne.s32.totalorder %s78, %s81
      %p87 = scmp.eq.s32.totalorder %s19, 0
      %p88 = por %p86, %p87
      %p89 = scmp.ne.s32.totalorder %s78, %s81
      %p90 = scmp.eq.s32.totalorder %s24, 1
      %p91 = por %p89, %p90
      %p92 = scmp.ne.s32.totalorder %s81, %s82
      %p93 = scmp.eq.s32.totalorder %s24, 0
      %p94 = por %p92, %p93
      %p95 = scmp.ne.s32.totalorder %s81, %s82
      %p96 = scmp.eq.s32.totalorder %s25, 1
      %p97 = por %p95, %p96
      %p99 = scmp.ne.s32.totalorder %s82, %s98
      %p100 = scmp.eq.s32.totalorder %s25, 0
      %p101 = por %p99, %p100
      %s102 = ssub.s32 %s28, %s37
      %s103 = ssub.s32 %s26, %s45
      %s104 = sor.u32 %s102, %s103
      %p105 = scmp.eq.s32.totalorder %s104, 0
      %s107 = sadd.s32 %s106, 1
      %s108 = scalar_select %p105, %s106, %s107
      %p111 = pneg %p105
      %p112 = scmp.eq.s32.totalorder %s19, 1
      %p113 = por %p111, %p112
      %p114 = scmp.ne.s32.totalorder %s106, %s109
      %p115 = scmp.eq.s32.totalorder %s19, 0
      %p116 = por %p114, %p115
      %p117 = scmp.ne.s32.totalorder %s106, %s109
      %p118 = scmp.eq.s32.totalorder %s24, 1
      %p119 = por %p117, %p118
      %p120 = scmp.ne.s32.totalorder %s109, %s110
      %p121 = scmp.eq.s32.totalorder %s24, 0
      %p122 = por %p120, %p121
      %p123 = scmp.ne.s32.totalorder %s109, %s110
      %p124 = scmp.eq.s32.totalorder %s25, 1
      %p125 = por %p123, %p124
      %p127 = scmp.ne.s32.totalorder %s110, %s126
      %p128 = scmp.eq.s32.totalorder %s25, 0
      %p129 = por %p127, %p128
      %s130 = ssub.s32 %s28, %s37
      %s131 = ssub.s32 %s26, %s45
      %s132 = sor.u32 %s130, %s131
      %p133 = scmp.eq.s32.totalorder %s132, 0
      %s135 = sadd.s32 %s134, 1
      %s136 = scalar_select %p133, %s134, %s135
      %p139 = pneg %p133
      %p140 = scmp.eq.s32.totalorder %s19, 1
      %p141 = por %p139, %p140
      %p142 = scmp.ne.s32.totalorder %s134, %s137
      %p143 = scmp.eq.s32.totalorder %s19, 0
      %p144 = por %p142, %p143
      %p145 = scmp.ne.s32.totalorder %s134, %s137
      %p146 = scmp.eq.s32.totalorder %s24, 1
      %p147 = por %p145, %p146
      %p148 = scmp.ne.s32.totalorder %s137, %s138
      %p149 = scmp.eq.s32.totalorder %s24, 0
      %p150 = por %p148, %p149
      %p151 = scmp.ne.s32.totalorder %s137, %s138
      %p152 = scmp.eq.s32.totalorder %s25, 1
      %p153 = por %p151, %p152
      %p155 = scmp.ne.s32.totalorder %s138, %s154
      %p156 = scmp.eq.s32.totalorder %s25, 0
      %p157 = por %p155, %p156
      %s158 = ssub.s32 %s28, %s37
      %s159 = ssub.s32 %s26, %s45
      %s160 = sor.u32 %s158, %s159
      %p161 = scmp.eq.s32.totalorder %s160, 0
      %s163 = sadd.s32 %s162, 1
      %s164 = scalar_select %p161, %s162, %s163
      %p167 = pneg %p161
      %p168 = scmp.eq.s32.totalorder %s19, 1
      %p169 = por %p167, %p168
      %p170 = scmp.ne.s32.totalorder %s162, %s165
      %p171 = scmp.eq.s32.totalorder %s19, 0
      %p172 = por %p170, %p171
      %p173 = scmp.ne.s32.totalorder %s162, %s165
      %p174 = scmp.eq.s32.totalorder %s24, 1
      %p175 = por %p173, %p174
      %p176 = scmp.ne.s32.totalorder %s165, %s166
      %p177 = scmp.eq.s32.totalorder %s24, 0
      %p178 = por %p176, %p177
      %p179 = scmp.ne.s32.totalorder %s165, %s166
      %p180 = scmp.eq.s32.totalorder %s25, 1
      %p181 = por %p179, %p180
      %p183 = scmp.ne.s32.totalorder %s166, %s182
      %p184 = scmp.eq.s32.totalorder %s25, 0
      %p185 = por %p183, %p184
      %s186 = ssub.s32 %s27, %s41
      %s187 = ssub.s32 %s26, %s45
      %s188 = sor.u32 %s186, %s187
      %p189 = scmp.eq.s32.totalorder %s188, 0
      %s191 = sadd.s32 %s190, 1
      %s192 = scalar_select %p189, %s190, %s191
      %p195 = pneg %p189
      %p196 = scmp.eq.s32.totalorder %s19, 1
      %p197 = por %p195, %p196
      %p198 = scmp.ne.s32.totalorder %s190, %s193
      %p199 = scmp.eq.s32.totalorder %s19, 0
      %p200 = por %p198, %p199
      %p201 = scmp.ne.s32.totalorder %s190, %s193
      %p202 = scmp.eq.s32.totalorder %s24, 1
      %p203 = por %p201, %p202
      %p204 = scmp.ne.s32.totalorder %s193, %s194
      %p205 = scmp.eq.s32.totalorder %s24, 0
      %p206 = por %p204, %p205
      %p207 = scmp.ne.s32.totalorder %s193, %s194
      %p208 = scmp.eq.s32.totalorder %s25, 1
      %p209 = por %p207, %p208
      %p211 = scmp.ne.s32.totalorder %s194, %s210
      %p212 = scmp.eq.s32.totalorder %s25, 0
      %p213 = por %p211, %p212
      %s214 = ssub.s32 %s27, %s41
      %s215 = ssub.s32 %s26, %s45
      %s216 = sor.u32 %s214, %s215
      %p217 = scmp.eq.s32.totalorder %s216, 0
      %s219 = sadd.s32 %s218, 1
      %s220 = scalar_select %p217, %s218, %s219
      %p223 = pneg %p217
      %p224 = scmp.eq.s32.totalorder %s19, 1
      %p225 = por %p223, %p224
      %p226 = scmp.ne.s32.totalorder %s218, %s221
      %p227 = scmp.eq.s32.totalorder %s19, 0
      %p228 = por %p226, %p227
      %p229 = scmp.ne.s32.totalorder %s218, %s221
      %p230 = scmp.eq.s32.totalorder %s24, 1
      %p231 = por %p229, %p230
      %p232 = scmp.ne.s32.totalorder %s221, %s222
      %p233 = scmp.eq.s32.totalorder %s24, 0
      %p234 = por %p232, %p233
      %p235 = scmp.ne.s32.totalorder %s221, %s222
      %p236 = scmp.eq.s32.totalorder %s25, 1
      %p237 = por %p235, %p236
      %p239 = scmp.ne.s32.totalorder %s222, %s238
      %p240 = scmp.eq.s32.totalorder %s25, 0
      %p241 = por %p239, %p240
      %p242 = scmp.le.s32.totalorder 1, %s19
      %p243 = scmp.lt.s32.totalorder %s19, 3
      %p244 = pnand %p242, %p243
      %p245 = pneg %p244
      // Predicated region
      $region9: #{tpu_custom_call.1} parent=5 // pred_check
        _
      $region10: #{tpu_custom_call.1} parent=5 // pred_check_branch
        %247 = sbr.rel (%p244) target = $region12
      $region11: #{tpu_custom_call.1} parent=5 // pred_region
        %s248 = ssub.s32 %s19, 1
        // Predicated region
        $region13: #{tpu_custom_call.1} parent=11 // pred_check
          %p249 = pneg %p122
        $region14: #{tpu_custom_call.1} parent=11 // pred_check_branch
          %251 = sbr.rel (%p249) target = $region16
        $region15: #{tpu_custom_call.1} parent=11 // pred_region
          %s252 = smul.u32 2, %s31
          %p253 = scmp.lt.s32.totalorder %s252, 1
          %s254 = scalar_select %p253, %s252, 1
          %p255 = scmp.lt.s32.totalorder %s29, 0
          %s256 = scalar_select %p255, %s29, 0
          %s257 = sadd.s32 %s256, %s254
          %s258 = smul.addr %s257, 8
          %s259 = scalar_lea.vmem %s2, %s258
          %s260 = smul.u32 2, %s31
        $region16: #{tpu_custom_call.1} parent=11 // pred_fallthru
          _
        // Predicated region
        $region17: #{tpu_custom_call.1} parent=11 // pred_check
          %p261 = pneg %p150
        $region18: #{tpu_custom_call.1} parent=11 // pred_check_branch
          %263 = sbr.rel (%p261) target = $region20
        $region19: #{tpu_custom_call.1} parent=11 // pred_region
          %s264 = smul.u32 2, %s31
          %p265 = scmp.lt.s32.totalorder %s264, 1
          %s266 = scalar_select %p265, %s264, 1
          %p267 = scmp.lt.s32.totalorder %s29, 0
          %s268 = scalar_select %p267, %s29, 0
          %s269 = sadd.s32 %s268, %s266
          %s270 = smul.addr %s269, 8
          %s271 = scalar_lea.vmem %s3, %s270
          %s272 = smul.u32 2, %s31
        $region20: #{tpu_custom_call.1} parent=11 // pred_fallthru
          _
        // Predicated region
        $region21: #{tpu_custom_call.1} parent=11 // pred_check
          %p273 = pneg %p178
        $region22: #{tpu_custom_call.1} parent=11 // pred_check_branch
          %275 = sbr.rel (%p273) target = $region24
        $region23: #{tpu_custom_call.1} parent=11 // pred_region
          %s276 = smul.u32 2, %s31
          %p277 = scmp.lt.s32.totalorder %s276, 1
          %s278 = scalar_select %p277, %s276, 1
          %p279 = scmp.lt.s32.totalorder %s29, 0
          %s280 = scalar_select %p279, %s29, 0
          %s281 = sadd.s32 %s280, %s278
          %s282 = smul.addr %s281, 8
          %s283 = scalar_lea.vmem %s4, %s282
          %s284 = smul.u32 2, %s31
        $region24: #{tpu_custom_call.1} parent=11 // pred_fallthru
          _
      $region12: #{tpu_custom_call.1} parent=5 // pred_fallthru
        _
      %p285 = scmp.lt.s32.totalorder %s19, 2
      // Predicated region
      $region25: #{tpu_custom_call.1} parent=5 // pred_check
        %p286 = pneg %p285
      $region26: #{tpu_custom_call.1} parent=5 // pred_check_branch
        %288 = sbr.rel (%p286) target = $region28
      $region27: #{tpu_custom_call.1} parent=5 // pred_region
        // Predicated region
        $region29: #{tpu_custom_call.1} parent=27 // pred_check
          %p289 = pneg %p60
        $region30: #{tpu_custom_call.1} parent=27 // pred_check_branch
          %291 = sbr.rel (%p289) target = $region32
        $region31: #{tpu_custom_call.1} parent=27 // pred_region
          %s292 = smul.u32 2, %s27
          %p293 = scmp.lt.s32.totalorder %s292, 3
          %s294 = scalar_select %p293, %s292, 3
          %p295 = scmp.lt.s32.totalorder %s28, 0
          %s296 = scalar_select %p295, %s28, 0
          %s297 = sadd.s32 %s296, %s294
          %s298 = smul.addr %s297, 8
          %s299 = scalar_lea.vmem %s0, %s298
          %s300 = smul.u32 2, %s27
        $region32: #{tpu_custom_call.1} parent=27 // pred_fallthru
          _
        // Predicated region
        $region33: #{tpu_custom_call.1} parent=27 // pred_check
          %p301 = pneg %p88
        $region34: #{tpu_custom_call.1} parent=27 // pred_check_branch
          %303 = sbr.rel (%p301) target = $region36
        $region35: #{tpu_custom_call.1} parent=27 // pred_region
          %s304 = smul.u32 2, %s27
          %p305 = scmp.lt.s32.totalorder %s304, 3
          %s306 = scalar_select %p305, %s304, 3
          %p307 = scmp.lt.s32.totalorder %s28, 0
          %s308 = scalar_select %p307, %s28, 0
          %s309 = sadd.s32 %s308, %s306
          %s310 = smul.addr %s309, 8
          %s311 = scalar_lea.vmem %s1, %s310
          %s312 = smul.u32 2, %s27
        $region36: #{tpu_custom_call.1} parent=27 // pred_fallthru
          _
      $region28: #{tpu_custom_call.1} parent=5 // pred_fallthru
        _
      %p313 = scmp.le.s32.totalorder 1, %s19
      %p314 = scmp.lt.s32.totalorder %s19, 3
      %p315 = pnand %p313, %p314
      %p316 = pneg %p315
      // Predicated region
      $region37: #{tpu_custom_call.1} parent=5 // pred_check
        _
      $region38: #{tpu_custom_call.1} parent=5 // pred_check_branch
        %318 = sbr.rel (%p315) target = $region40
      $region39: #{tpu_custom_call.1} parent=5 // pred_region
        %s319 = ssub.s32 %s19, 1
        %s320 = smul.u32 2, %s30
        %p321 = scmp.lt.s32.totalorder %s320, 3
        %s322 = scalar_select %p321, %s320, 3
        %p323 = scmp.lt.s32.totalorder %s31, 0
        %s324 = scalar_select %p323, %s31, 0
        %s325 = sadd.s32 %s324, %s322
        %s326 = smul.addr %s325, 8
        %s327 = scalar_lea.vmem %s0, %s326
        %p328 = pneg %p66
        %p329 = pneg %p63
        %s330 = smul.u32 2, %s30
        %p331 = scmp.lt.s32.totalorder %s330, 3
        %s332 = scalar_select %p331, %s330, 3
        %p333 = scmp.lt.s32.totalorder %s31, 0
        %s334 = scalar_select %p333, %s31, 0
        %s335 = sadd.s32 %s334, %s332
        %s336 = smul.addr %s335, 8
        %s337 = scalar_lea.vmem %s1, %s336
        %p338 = pneg %p94
        %p339 = pneg %p91
        %s340 = smul.u32 2, %s31
        %p341 = scmp.lt.s32.totalorder %s340, 1
        %s342 = scalar_select %p341, %s340, 1
        %p343 = scmp.lt.s32.totalorder %s29, 0
        %s344 = scalar_select %p343, %s29, 0
        %s345 = sadd.s32 %s344, %s342
        %s346 = smul.addr %s345, 8
        %s347 = scalar_lea.vmem %s2, %s346
        %p348 = pneg %p122
        %p349 = pneg %p119
        %s350 = smul.u32 2, %s31
        %p351 = scmp.lt.s32.totalorder %s350, 1
        %s352 = scalar_select %p351, %s350, 1
        %p353 = scmp.lt.s32.totalorder %s29, 0
        %s354 = scalar_select %p353, %s29, 0
        %s355 = sadd.s32 %s354, %s352
        %s356 = smul.addr %s355, 8
        %s357 = scalar_lea.vmem %s3, %s356
        %p358 = pneg %p150
        %p359 = pneg %p147
        %s360 = smul.u32 2, %s31
        %p361 = scmp.lt.s32.totalorder %s360, 1
        %s362 = scalar_select %p361, %s360, 1
        %p363 = scmp.lt.s32.totalorder %s29, 0
        %s364 = scalar_select %p363, %s29, 0
        %s365 = sadd.s32 %s364, %s362
        %s366 = smul.addr %s365, 8
        %s367 = scalar_lea.vmem %s4, %s366
        %p368 = pneg %p178
        %p369 = pneg %p175
        %p370 = pneg %p206
        %p371 = pneg %p203
        %s372 = sand.u32 %s193, 1
        %s373 = scalar_lea.sflag [#allocation3], %s372
        %s374 = sand.u32 %s193, 1
        %s375 = smul.addr %s374, 16
        %s376 = scalar_lea.vmem [#allocation2], %s375
        %p377 = pneg %p234
        %p378 = pneg %p231
        %s379 = sand.u32 %s221, 1
        %s380 = scalar_lea.sflag [#allocation5], %s379
        %s381 = sand.u32 %s221, 1
        %s382 = smul.addr %s381, 16
        %s383 = scalar_lea.vmem [#allocation4], %s382
        %s384 = smul.u32 2, %s30
        %p385 = scmp.lt.s32.totalorder %s384, 3
        %s386 = scalar_select %p385, %s384, 3
        %p387 = scmp.lt.s32.totalorder %s31, 0
        %s388 = scalar_select %p387, %s31, 0
        %s389 = sadd.s32 %s388, %s386
        %s390 = smul.addr %s389, 8
        %s391 = scalar_lea.vmem %s0, %s390
        %s392 = smul.u32 2, %s30
        %s393 = smul.u32 2, %s30
        %p394 = scmp.lt.s32.totalorder %s393, 3
        %s395 = scalar_select %p394, %s393, 3
        %p396 = scmp.lt.s32.totalorder %s31, 0
        %s397 = scalar_select %p396, %s31, 0
        %s398 = sadd.s32 %s397, %s395
        %s399 = smul.addr %s398, 8
        %s400 = scalar_lea.vmem %s1, %s399
        %s401 = smul.u32 2, %s30
        %s402 = smul.u32 2, %s31
        %p403 = scmp.lt.s32.totalorder %s402, 1
        %s404 = scalar_select %p403, %s402, 1
        %p405 = scmp.lt.s32.totalorder %s29, 0
        %s406 = scalar_select %p405, %s29, 0
        %s407 = sadd.s32 %s406, %s404
        %s408 = smul.addr %s407, 8
        %s409 = scalar_lea.vmem %s2, %s408
        %s410 = smul.u32 2, %s31
        %s411 = smul.u32 2, %s31
        %p412 = scmp.lt.s32.totalorder %s411, 1
        %s413 = scalar_select %p412, %s411, 1
        %p414 = scmp.lt.s32.totalorder %s29, 0
        %s415 = scalar_select %p414, %s29, 0
        %s416 = sadd.s32 %s415, %s413
        %s417 = smul.addr %s416, 8
        %s418 = scalar_lea.vmem %s3, %s417
        %s419 = smul.u32 2, %s31
        %s420 = smul.u32 2, %s31
        %p421 = scmp.lt.s32.totalorder %s420, 1
        %s422 = scalar_select %p421, %s420, 1
        %p423 = scmp.lt.s32.totalorder %s29, 0
        %s424 = scalar_select %p423, %s29, 0
        %s425 = sadd.s32 %s424, %s422
        %s426 = smul.addr %s425, 8
        %s427 = scalar_lea.vmem %s4, %s426
        %s428 = smul.u32 2, %s31
        %s429 = smul.u32 2, %s30
        %s430 = smul.u32 2, %s30
        %p431 = scmp.eq.s32.totalorder %s31, 0
        // Predicated region
        $region41: #{tpu_custom_call.1} parent=39 // pred_check
          %p432 = pneg %p431
        $region42: #{tpu_custom_call.1} parent=39 // pred_check_branch
          %434 = sbr.rel (%p432) target = $region44
        $region43: #{tpu_custom_call.1} parent=39 // pred_region
          %435 = vst [vmem:[%s376] sm:$0xff] 0.0
          %436 = vst [vmem:[%s376 + $0x8] sm:$0xff] 0.0
          %437 = vst [vmem:[%s383] sm:$0xff] 0.0
          %438 = vst [vmem:[%s383 + $0x8] sm:$0xff] 0.0
        $region44: #{tpu_custom_call.1} parent=39 // pred_fallthru
          _
        %v439 = vld [vmem:[%s391] sm:$0xff]
        %v440 = vld [vmem:[%s391 + $0x8] sm:$0xff]
        %v441 = vld [vmem:[%s400] sm:$0xff]
        %v442 = vld [vmem:[%s400 + $0x8] sm:$0xff]
        %v443 = vld [vmem:[%s409] sm:$0xff]
        %v444 = vld [vmem:[%s409 + $0x8] sm:$0xff]
        %vm445 = vcmask 130048
        %v447 = vsel %vm445, %v439, 0
        %v450 = vsel %vm445, %v440, 0
        %452 = vmatprep.subr.mxu0 0.0
        %453 = vmatpush1.msra.mxu0 %v443
        %454 = vmatprep.subr.mxu0 0.0
        %455 = vmatpush1.msra.mxu0 %v444
        %456 = vmatprep.subr.mxu0 0.0
        %457 = vmatpush1.msra.mxu0 0.0
        %458 = vmatprep.subr.mxu0 0.0
        %459 = vmatpush1.msra.mxu0 0.0
        %460 = vmatprep.subr.mxu0 0.0
        %461 = vmatpush1.msra.mxu0 0.0
        %462 = vmatprep.subr.mxu0 0.0
        %463 = vmatpush1.msra.mxu0 0.0
        %464 = vmatprep.subr.mxu0 0.0
        %465 = vmatpush1.msra.mxu0 0.0
        %466 = vmatprep.subr.mxu0 0.0
        %467 = vmatpush1.msra.mxu0 0.0
        %468 = vmatprep.subr.mxu0 0.0
        %469 = vmatpush1.msra.mxu0 0.0
        %470 = vmatprep.subr.mxu0 0.0
        %471 = vmatpush1.msra.mxu0 0.0
        %472 = vmatprep.subr.mxu0 0.0
        %473 = vmatpush1.msra.mxu0 0.0
        %474 = vmatprep.subr.mxu0 0.0
        %475 = vmatpush1.msra.mxu0 0.0
        %476 = vmatprep.subr.mxu0 0.0
        %477 = vmatpush1.msra.mxu0 0.0
        %478 = vmatprep.subr.mxu0 0.0
        %479 = vmatpush1.msra.mxu0 0.0
        %480 = vmatprep.subr.mxu0 0.0
        %481 = vmatpush1.msra.mxu0 0.0
        %482 = vmatprep.subr.mxu0 0.0
        %483 = vmatpush1.msra.mxu0 0.0
        %484 = vmatprep.subr.mxu0 0.0
        %485 = vmatpush1.msra.mxu0 0.0
        %486 = vmatprep.subr.mxu0 0.0
        %487 = vmatpush1.msra.mxu0 0.0
        %488 = vmatprep.subr.mxu0 0.0
        %489 = vmatpush1.msra.mxu0 0.0
        %490 = vmatprep.subr.mxu0 0.0
        %491 = vmatpush1.msra.mxu0 0.0
        %492 = vmatprep.subr.mxu0 0.0
        %493 = vmatpush1.msra.mxu0 0.0
        %494 = vmatprep.subr.mxu0 0.0
        %495 = vmatpush1.msra.mxu0 0.0
        %496 = vmatprep.subr.mxu0 0.0
        %497 = vmatpush1.msra.mxu0 0.0
        %498 = vmatprep.subr.mxu0 0.0
        %499 = vmatpush1.msra.mxu0 0.0
        %500 = vmatprep.subr.mxu0 0.0
        %501 = vmatpush1.msra.mxu0 0.0
        %502 = vmatprep.subr.mxu0 0.0
        %503 = vmatpush1.msra.mxu0 0.0
        %504 = vmatprep.subr.mxu0 0.0
        %505 = vmatpush1.msra.mxu0 0.0
        %506 = vmatprep.subr.mxu0 0.0
        %507 = vmatpush1.msra.mxu0 0.0
        %508 = vmatprep.subr.mxu0 0.0
        %509 = vmatpush1.msra.mxu0 0.0
        %510 = vmatprep.subr.mxu0 0.0
        %511 = vmatpush1.msra.mxu0 0.0
        %512 = vmatprep.subr.mxu0 0.0
        %513 = vmatpush1.msra.mxu0 0.0
        %514 = vmatprep.subr.mxu0 0.0
        %515 = vmatpush1.msra.mxu0 0.0
        %516 = vmatprep.mubr.f32.mxu0 0.0
        %517 = vmatmul.mubr.f32.gmra.mrb[0].mxu0 %v447
        %v518 = vpop.f32.mrb[0].mxu0
        %v519 = vadd.f32 0.0, %v518
        %v520 = vpop.f32.mrb[0].mxu0
        %521 = vmatprep.mubr.f32.mxu0 0.0
        %522 = vmatmul.mubr.f32.gmra.mrb[0].mxu0 %v450
        %v523 = vpop.f32.mrb[0].mxu0
        %v524 = vadd.f32 0.0, %v523
        %v525 = vpop.f32.mrb[0].mxu0
        %526 = vdwg.mxu0
        %v527 = vld [vmem:[%s418] sm:$0xff]
        %v528 = vld [vmem:[%s418 + $0x8] sm:$0xff]
        %v530 = vsel %vm445, %v441, 0
        %v533 = vsel %vm445, %v442, 0
        %535 = vmatprep.subr.mxu0 0.0
        %536 = vmatpush1.msra.mxu0 %v527
        %537 = vmatprep.subr.mxu0 0.0
        %538 = vmatpush1.msra.mxu0 %v528
        %539 = vmatprep.subr.mxu0 0.0
        %540 = vmatpush1.msra.mxu0 0.0
        %541 = vmatprep.subr.mxu0 0.0
        %542 = vmatpush1.msra.mxu0 0.0
        %543 = vmatprep.subr.mxu0 0.0
        %544 = vmatpush1.msra.mxu0 0.0
        %545 = vmatprep.subr.mxu0 0.0
        %546 = vmatpush1.msra.mxu0 0.0
        %547 = vmatprep.subr.mxu0 0.0
        %548 = vmatpush1.msra.mxu0 0.0
        %549 = vmatprep.subr.mxu0 0.0
        %550 = vmatpush1.msra.mxu0 0.0
        %551 = vmatprep.subr.mxu0 0.0
        %552 = vmatpush1.msra.mxu0 0.0
        %553 = vmatprep.subr.mxu0 0.0
        %554 = vmatpush1.msra.mxu0 0.0
        %555 = vmatprep.subr.mxu0 0.0
        %556 = vmatpush1.msra.mxu0 0.0
        %557 = vmatprep.subr.mxu0 0.0
        %558 = vmatpush1.msra.mxu0 0.0
        %559 = vmatprep.subr.mxu0 0.0
        %560 = vmatpush1.msra.mxu0 0.0
        %561 = vmatprep.subr.mxu0 0.0
        %562 = vmatpush1.msra.mxu0 0.0
        %563 = vmatprep.subr.mxu0 0.0
        %564 = vmatpush1.msra.mxu0 0.0
        %565 = vmatprep.subr.mxu0 0.0
        %566 = vmatpush1.msra.mxu0 0.0
        %567 = vmatprep.subr.mxu0 0.0
        %568 = vmatpush1.msra.mxu0 0.0
        %569 = vmatprep.subr.mxu0 0.0
        %570 = vmatpush1.msra.mxu0 0.0
        %571 = vmatprep.subr.mxu0 0.0
        %572 = vmatpush1.msra.mxu0 0.0
        %573 = vmatprep.subr.mxu0 0.0
        %574 = vmatpush1.msra.mxu0 0.0
        %575 = vmatprep.subr.mxu0 0.0
        %576 = vmatpush1.msra.mxu0 0.0
        %577 = vmatprep.subr.mxu0 0.0
        %578 = vmatpush1.msra.mxu0 0.0
        %579 = vmatprep.subr.mxu0 0.0
        %580 = vmatpush1.msra.mxu0 0.0
        %581 = vmatprep.subr.mxu0 0.0
        %582 = vmatpush1.msra.mxu0 0.0
        %583 = vmatprep.subr.mxu0 0.0
        %584 = vmatpush1.msra.mxu0 0.0
        %585 = vmatprep.subr.mxu0 0.0
        %586 = vmatpush1.msra.mxu0 0.0
        %587 = vmatprep.subr.mxu0 0.0
        %588 = vmatpush1.msra.mxu0 0.0
        %589 = vmatprep.subr.mxu0 0.0
        %590 = vmatpush1.msra.mxu0 0.0
        %591 = vmatprep.subr.mxu0 0.0
        %592 = vmatpush1.msra.mxu0 0.0
        %593 = vmatprep.subr.mxu0 0.0
        %594 = vmatpush1.msra.mxu0 0.0
        %595 = vmatprep.subr.mxu0 0.0
        %596 = vmatpush1.msra.mxu0 0.0
        %597 = vmatprep.subr.mxu0 0.0
        %598 = vmatpush1.msra.mxu0 0.0
        %599 = vmatprep.mubr.f32.mxu0 0.0
        %600 = vmatmul.mubr.f32.gmra.mrb[0].mxu0 %v530
        %v601 = vpop.f32.mrb[0].mxu0
        %v602 = vadd.f32 0.0, %v601
        %v603 = vpop.f32.mrb[0].mxu0
        %604 = vmatprep.mubr.f32.mxu0 0.0
        %605 = vmatmul.mubr.f32.gmra.mrb[0].mxu0 %v533
        %v606 = vpop.f32.mrb[0].mxu0
        %v607 = vadd.f32 0.0, %v606
        %v608 = vpop.f32.mrb[0].mxu0
        %609 = vdwg.mxu0
        %v610 = vadd.f32 %v439, %v441
        %v611 = vadd.f32 %v440, %v442
        %v612 = vld [vmem:[%s427] sm:$0xff]
        %v613 = vld [vmem:[%s427 + $0x8] sm:$0xff]
        %v615 = vsel %vm445, %v610, 0
        %v618 = vsel %vm445, %v611, 0
        %620 = vmatprep.subr.mxu0 0.0
        %621 = vmatpush1.msra.mxu0 %v612
        %622 = vmatprep.subr.mxu0 0.0
        %623 = vmatpush1.msra.mxu0 %v613
        %624 = vmatprep.subr.mxu0 0.0
        %625 = vmatpush1.msra.mxu0 0.0
        %626 = vmatprep.subr.mxu0 0.0
        %627 = vmatpush1.msra.mxu0 0.0
        %628 = vmatprep.subr.mxu0 0.0
        %629 = vmatpush1.msra.mxu0 0.0
        %630 = vmatprep.subr.mxu0 0.0
        %631 = vmatpush1.msra.mxu0 0.0
        %632 = vmatprep.subr.mxu0 0.0
        %633 = vmatpush1.msra.mxu0 0.0
        %634 = vmatprep.subr.mxu0 0.0
        %635 = vmatpush1.msra.mxu0 0.0
        %636 = vmatprep.subr.mxu0 0.0
        %637 = vmatpush1.msra.mxu0 0.0
        %638 = vmatprep.subr.mxu0 0.0
        %639 = vmatpush1.msra.mxu0 0.0
        %640 = vmatprep.subr.mxu0 0.0
        %641 = vmatpush1.msra.mxu0 0.0
        %642 = vmatprep.subr.mxu0 0.0
        %643 = vmatpush1.msra.mxu0 0.0
        %644 = vmatprep.subr.mxu0 0.0
        %645 = vmatpush1.msra.mxu0 0.0
        %646 = vmatprep.subr.mxu0 0.0
        %647 = vmatpush1.msra.mxu0 0.0
        %648 = vmatprep.subr.mxu0 0.0
        %649 = vmatpush1.msra.mxu0 0.0
        %650 = vmatprep.subr.mxu0 0.0
        %651 = vmatpush1.msra.mxu0 0.0
        %652 = vmatprep.subr.mxu0 0.0
        %653 = vmatpush1.msra.mxu0 0.0
        %654 = vmatprep.subr.mxu0 0.0
        %655 = vmatpush1.msra.mxu0 0.0
        %656 = vmatprep.subr.mxu0 0.0
        %657 = vmatpush1.msra.mxu0 0.0
        %658 = vmatprep.subr.mxu0 0.0
        %659 = vmatpush1.msra.mxu0 0.0
        %660 = vmatprep.subr.mxu0 0.0
        %661 = vmatpush1.msra.mxu0 0.0
        %662 = vmatprep.subr.mxu0 0.0
        %663 = vmatpush1.msra.mxu0 0.0
        %664 = vmatprep.subr.mxu0 0.0
        %665 = vmatpush1.msra.mxu0 0.0
        %666 = vmatprep.subr.mxu0 0.0
        %667 = vmatpush1.msra.mxu0 0.0
        %668 = vmatprep.subr.mxu0 0.0
        %669 = vmatpush1.msra.mxu0 0.0
        %670 = vmatprep.subr.mxu0 0.0
        %671 = vmatpush1.msra.mxu0 0.0
        %672 = vmatprep.subr.mxu0 0.0
        %673 = vmatpush1.msra.mxu0 0.0
        %674 = vmatprep.subr.mxu0 0.0
        %675 = vmatpush1.msra.mxu0 0.0
        %676 = vmatprep.subr.mxu0 0.0
        %677 = vmatpush1.msra.mxu0 0.0
        %678 = vmatprep.subr.mxu0 0.0
        %679 = vmatpush1.msra.mxu0 0.0
        %680 = vmatprep.subr.mxu0 0.0
        %681 = vmatpush1.msra.mxu0 0.0
        %682 = vmatprep.subr.mxu0 0.0
        %683 = vmatpush1.msra.mxu0 0.0
        %684 = vmatprep.mubr.f32.mxu0 0.0
        %685 = vmatmul.mubr.f32.gmra.mrb[0].mxu0 %v615
        %v686 = vpop.f32.mrb[0].mxu0
        %v687 = vadd.f32 0.0, %v686
        %v688 = vpop.f32.mrb[0].mxu0
        %689 = vmatprep.mubr.f32.mxu0 0.0
        %690 = vmatmul.mubr.f32.gmra.mrb[0].mxu0 %v618
        %v691 = vpop.f32.mrb[0].mxu0
        %v692 = vadd.f32 0.0, %v691
        %v693 = vpop.f32.mrb[0].mxu0
        %694 = vdwg.mxu0
        %v695 = vld [vmem:[%s376] sm:$0xff]
        %v696 = vld [vmem:[%s376 + $0x8] sm:$0xff]
        %v697 = vsub.f32 %v519, %v602
        %v698 = vsub.f32 %v524, %v607
        %v699 = vadd.f32 %v695, %v697
        %v700 = vadd.f32 %v696, %v698
        %701 = vst [vmem:[%s376] sm:$0xff] %v699
        %702 = vst [vmem:[%s376 + $0x8] sm:$0xff] %v700
        %v703 = vld [vmem:[%s383] sm:$0xff]
        %v704 = vld [vmem:[%s383 + $0x8] sm:$0xff]
        %v705 = vadd.f32 %v519, %v602
        %v706 = vadd.f32 %v524, %v607
        %v707 = vsub.f32 %v687, %v705
        %v708 = vsub.f32 %v692, %v706
        %v709 = vadd.f32 %v703, %v707
        %v710 = vadd.f32 %v704, %v708
        %711 = vst [vmem:[%s383] sm:$0xff] %v709
        %712 = vst [vmem:[%s383 + $0x8] sm:$0xff] %v710
        %s713 = sand.u32 %s193, 1
        %s714 = scalar_lea.sflag [#allocation3], %s713
        %s715 = sand.u32 %s193, 1
        %s716 = smul.addr %s715, 16
        %s717 = scalar_lea.vmem [#allocation2], %s716
        %s718 = sand.u32 %s221, 1
        %s719 = scalar_lea.sflag [#allocation5], %s718
        %s720 = sand.u32 %s221, 1
        %s721 = smul.addr %s720, 16
        %s722 = scalar_lea.vmem [#allocation4], %s721
        // Predicated region
        $region45: #{tpu_custom_call.1} parent=39 // pred_check
          %p723 = pneg %p203
        $region46: #{tpu_custom_call.1} parent=39 // pred_check_branch
          %725 = sbr.rel (%p723) target = $region48
        $region47: #{tpu_custom_call.1} parent=39 // pred_region
          %s726 = smul.u32 2, %s30
          %s728 = ssub.s32 256, 256
          %729 = vsyncadd %s714, %s728
          %s730 = sadd.s32 %s29, %s726
          %s731 = smul.addr %s730, 128
          %s732 = scalar_lea.hbm %s5, %s731
          %s733 = sshll.u32 %s717, 4
          %s734 = int_to_ptr.vmem [resolvable:$true] %s733
          %739 = dma.vmem_to_hbm [thread:$0]  %s734, 256, %s732, %s714, 128, 128, 8
        $region48: #{tpu_custom_call.1} parent=39 // pred_fallthru
          _
        // Predicated region
        $region49: #{tpu_custom_call.1} parent=39 // pred_check
          %p740 = pneg %p231
        $region50: #{tpu_custom_call.1} parent=39 // pred_check_branch
          %742 = sbr.rel (%p740) target = $region52
        $region51: #{tpu_custom_call.1} parent=39 // pred_region
          %s743 = smul.u32 2, %s30
          %s745 = ssub.s32 256, 256
          %746 = vsyncadd %s719, %s745
          %s747 = sadd.s32 %s29, %s743
          %s748 = smul.addr %s747, 128
          %s749 = scalar_lea.hbm %s6, %s748
          %s750 = sshll.u32 %s722, 4
          %s751 = int_to_ptr.vmem [resolvable:$true] %s750
          %756 = dma.vmem_to_hbm [thread:$0]  %s751, 256, %s749, %s719, 128, 128, 8
        $region52: #{tpu_custom_call.1} parent=39 // pred_fallthru
          _
      $region40: #{tpu_custom_call.1} parent=5 // pred_fallthru
        _
      %p757 = scmp.le.s32.totalorder 2, %s19
      // Predicated region
      $region53: #{tpu_custom_call.1} parent=5 // pred_check
        %p758 = pneg %p757
      $region54: #{tpu_custom_call.1} parent=5 // pred_check_branch
        %760 = sbr.rel (%p758) target = $region56
      $region55: #{tpu_custom_call.1} parent=5 // pred_region
        %s761 = ssub.s32 %s19, 2
        // Predicated region
        $region57: #{tpu_custom_call.1} parent=55 // pred_check
          %p762 = pneg %p209
        $region58: #{tpu_custom_call.1} parent=55 // pred_check_branch
          %764 = sbr.rel (%p762) target = $region60
        $region59: #{tpu_custom_call.1} parent=55 // pred_region
          %s765 = sand.u32 %s194, 1
          %s766 = scalar_lea.sflag [#allocation3], %s765
          %s767 = sand.u32 %s194, 1
          %s768 = smul.addr %s767, 16
          %s769 = scalar_lea.vmem [#allocation2], %s768
          %770 = dma.done %s766, 256
        $region60: #{tpu_custom_call.1} parent=55 // pred_fallthru
          _
        // Predicated region
        $region61: #{tpu_custom_call.1} parent=55 // pred_check
          %p771 = pneg %p237
        $region62: #{tpu_custom_call.1} parent=55 // pred_check_branch
          %773 = sbr.rel (%p771) target = $region64
        $region63: #{tpu_custom_call.1} parent=55 // pred_region
          %s774 = sand.u32 %s222, 1
          %s775 = scalar_lea.sflag [#allocation5], %s774
          %s776 = sand.u32 %s222, 1
          %s777 = smul.addr %s776, 16
          %s778 = scalar_lea.vmem [#allocation4], %s777
          %779 = dma.done %s775, 256
        $region64: #{tpu_custom_call.1} parent=55 // pred_fallthru
          _
      $region56: #{tpu_custom_call.1} parent=5 // pred_fallthru
        _
    $region6: #{tpu_custom_call.1} parent=1 // loop_footer
      %s23 = sadd.s32 1, %s19
    $region7: #{tpu_custom_call.1} parent=1 // loop_footer_branch
      %18 = sbr.rel target = $region3
    $region8: #{tpu_custom_call.1} parent=1 // loop_exit
      _
    %780 = vsyncpa [#allocation3], 1
    %s781 = scalar_lea.sflag [#allocation3], 1
    %782 = vsyncpa %s781, 1
    %783 = vsyncpa [#allocation5], 1
    %s784 = scalar_lea.sflag [#allocation5], 1
    %785 = vsyncpa %s784, 1

</llo_original>
